<compile_context>
chip_gen: v7x
topology: tpu7x:2x2x1
jax: 0.10.0
libtpu: 0.0.40
codegen_flags: <defaults>
</compile_context>

<pallas_src>
import functools

import numpy as np
import jax
import jax.numpy as jnp
from jax.experimental import pallas as pl
from jax.experimental.pallas import tpu as pltpu


# ----------------------------------------------------------------------------
# Kernel: per-row LayerNorm (normalize over the last dim) with affine params.
# ----------------------------------------------------------------------------
def _layernorm_kernel(x_ref, w_ref, b_ref, o_ref, *, eps, d_valid):
    # x_ref: [tm, Dp], w_ref/b_ref: [1, Dp], o_ref: [tm, Dp]
    x = x_ref[...].astype(jnp.float32)
    d_pad = x.shape[-1]

    if d_pad != d_valid:
        # Feature dim was lane-padded in the wrapper: mask pad lanes out of the
        # statistics so mean/var are computed over the real D columns only.
        lane = jax.lax.broadcasted_iota(jnp.int32, x.shape, dimension=1)
        valid = lane < d_valid
        xs = jnp.where(valid, x, 0.0)
        mu = jnp.sum(xs, axis=-1, keepdims=True) * (1.0 / d_valid)
        xc = jnp.where(valid, x - mu, 0.0)
    else:
        mu = jnp.mean(x, axis=-1, keepdims=True)
        xc = x - mu

    # Two-pass (centered) variance, unbiased=False -> divide by D.
    var = jnp.sum(xc * xc, axis=-1, keepdims=True) * (1.0 / d_valid)
    inv = jax.lax.rsqrt(var + eps)  # EUP slot, effectively free (mem-bound)

    w = w_ref[...].astype(jnp.float32)
    b = b_ref[...].astype(jnp.float32)
    o_ref[...] = (xc * inv * w + b).astype(o_ref.dtype)


# ----------------------------------------------------------------------------
# Wrapper
# ----------------------------------------------------------------------------
def layernorm_pallas(x, weight, bias, eps=1e-5):
    """LayerNorm over the last dim of x with per-feature weight/bias."""
    orig_shape = x.shape
    D = orig_shape[-1]
    assert weight.shape == (D,) and bias.shape == (D,)
    lead = orig_shape[:-1]
    M = int(np.prod(lead)) if lead else 1

    x2 = x.reshape(M, D)

    # ---- Optional lane padding: keep the feature dim a multiple of 128 so the
    # store path is lane-dense (vst, not vst.msk).  Only pad when the extra
    # HBM traffic is small (<= 12.5%); otherwise masked stores are cheaper.
    LANE = 128
    Dp = D
    if D % LANE != 0:
        d_round = ((D + LANE - 1) // LANE) * LANE
        if (d_round - D) * 8 <= D:
            Dp = d_round
    if Dp != D:
        x2 = jnp.pad(x2, ((0, 0), (0, Dp - D)))
        w2 = jnp.pad(weight, (0, Dp - D)).reshape(1, Dp)
        b2 = jnp.pad(bias, (0, Dp - D)).reshape(1, Dp)
    else:
        w2 = weight.reshape(1, Dp)
        b2 = bias.reshape(1, Dp)

    # ---- Row tile: sized from a VMEM byte budget, rounded to the sublane
    # packing multiple of the dtype (8 rows for f32, 16 for bf16, 32 for 8-bit).
    itemsize = jnp.dtype(x.dtype).itemsize
    packing = max(1, 4 // itemsize)
    row_mult = 8 * packing

    try:
        vmem_cap = int(pltpu.get_tpu_info().vmem_capacity_bytes)
    except Exception:
        vmem_cap = 64 * 1024 * 1024  # conservative: v7x per-TC VMEM

    # ~1-4 MiB of x per grid step (scaled down if VMEM is small, e.g. v7x).
    target_x_bytes = max(1 << 20, min(4 << 20, vmem_cap // 24))

    if M < row_mult:
        tm = M  # full-extent rows (tiny problem)
    else:
        tm_cap = (M // row_mult) * row_mult
        tm = target_x_bytes // (Dp * itemsize)
        tm = (tm // row_mult) * row_mult
        tm = max(row_mult, min(tm, tm_cap))
    grid = (pl.cdiv(M, tm),)

    # ---- VMEM budget: double-buffered x + out tiles, f32 intermediates of the
    # astype/center/scale chain, resident weight/bias, plus slack.
    tile_in_bytes = tm * Dp * itemsize
    tile_f32_bytes = tm * Dp * 4
    vmem_need = 4 * tile_in_bytes + 6 * tile_f32_bytes + 8 * Dp * 4 + (2 << 20)
    vmem_limit = int(min(vmem_cap, max(vmem_need, 32 << 20)))

    cost = pl.CostEstimate(
        flops=8 * M * Dp,
        transcendentals=M,
        bytes_accessed=(2 * M * Dp + 2 * Dp) * itemsize,
    )

    kernel = functools.partial(_layernorm_kernel, eps=eps, d_valid=D)

    out = pl.pallas_call(
        kernel,
        out_shape=jax.ShapeDtypeStruct((M, Dp), x.dtype),
        grid=grid,
        in_specs=[
            pl.BlockSpec((tm, Dp), lambda i: (i, 0)),   # x rows, lane-dense in D
            pl.BlockSpec((1, Dp), lambda i: (0, 0)),    # weight, stays resident
            pl.BlockSpec((1, Dp), lambda i: (0, 0)),    # bias, stays resident
        ],
        out_specs=pl.BlockSpec((tm, Dp), lambda i: (i, 0)),
        compiler_params=pltpu.CompilerParams(
            dimension_semantics=(pltpu.PARALLEL,),
            vmem_limit_bytes=vmem_limit,
        ),
        cost_estimate=cost,
    )(x2, w2, b2)

    if Dp != D:
        out = out[:, :D]
    return out.reshape(orig_shape)


# ----------------------------------------------------------------------------
# Pure-JAX reference (same math as the PyTorch module)
# ----------------------------------------------------------------------------
def _ref_layernorm(x, weight, bias, eps=1e-5):
    mu = jnp.mean(x, axis=-1, keepdims=True)
    var = jnp.mean((x - mu) ** 2, axis=-1, keepdims=True)
    return (x - mu) / jnp.sqrt(var + eps) * weight + bias


if __name__ == "__main__":
    key = jax.random.PRNGKey(0)
    kx, kw, kb, kx2, kw2, kb2 = jax.random.split(key, 6)

    # Main case: batch=2, seq=64, hidden=128 (hidden = normalized_shape).
    B, S, D = 2, 64, 128
    x = jax.random.normal(kx, (B, S, D), dtype=jnp.float32)
    weight = 1.0 + 0.1 * jax.random.normal(kw, (D,), dtype=jnp.float32)
    bias = 0.1 * jax.random.normal(kb, (D,), dtype=jnp.float32)

    y = layernorm_pallas(x, weight, bias)
    jax.block_until_ready(y)

    ref = _ref_layernorm(x, weight, bias)
    assert y.shape == x.shape
    assert jnp.allclose(y, ref, atol=1e-5, rtol=1e-5)

    # Awkward shape: rows not a multiple of 8 and feature dim not a multiple
    # of 128 -> exercises the partial-final-block and lane-sparse paths.
    D2 = 96
    x_odd = jax.random.normal(kx2, (3, 5, D2), dtype=jnp.float32)
    w_odd = 1.0 + 0.1 * jax.random.normal(kw2, (D2,), dtype=jnp.float32)
    b_odd = 0.1 * jax.random.normal(kb2, (D2,), dtype=jnp.float32)
    y_odd = layernorm_pallas(x_odd, w_odd, b_odd)
    jax.block_until_ready(y_odd)
    assert y_odd.shape == x_odd.shape
    assert jnp.allclose(y_odd, _ref_layernorm(x_odd, w_odd, b_odd),
                        atol=1e-5, rtol=1e-5)

    print("KERNEL_OK")
</pallas_src>

<mosaic_0001>
module attributes {stable_mosaic.version = 11 : i64} {
  func.func @_layernorm_kernel(%arg0: i32, %arg1: memref<128x128xf32, #tpu.memory_space<vmem>>, %arg2: memref<1x128xf32, #tpu.memory_space<vmem>>, %arg3: memref<1x128xf32, #tpu.memory_space<vmem>>, %arg4: memref<128x128xf32, #tpu.memory_space<vmem>>) attributes {dimension_semantics = [#tpu.dimension_semantics<parallel>], iteration_bounds = array<i64: 1>, scalar_prefetch = 0 : i64, scratch_operands = 0 : i64, tpu.core_type = #tpu.core_type<tc>, window_params = [{transform_indices = @transform_0, window_bounds = array<i64: 128, 128>}, {pipeline_mode = #tpu.pipeline_mode<synchronous>, transform_indices = @transform_1, window_bounds = array<i64: 1, 128>}, {pipeline_mode = #tpu.pipeline_mode<synchronous>, transform_indices = @transform_2, window_bounds = array<i64: 1, 128>}, {transform_indices = @transform_3, window_bounds = array<i64: 128, 128>}]} {
    %c0 = arith.constant 0 : index
    %c0_0 = arith.constant 0 : index
    %0 = vector.load %arg1[%c0, %c0_0] : memref<128x128xf32, #tpu.memory_space<vmem>>, vector<128x128xf32>
    %cst = arith.constant dense<0.000000e+00> : vector<128xf32>
    %1 = vector.multi_reduction <add>, %0, %cst [1] : vector<128x128xf32> to vector<128xf32>
    %2 = vector.shape_cast %1 : vector<128xf32> to vector<128x1xf32>
    %cst_1 = arith.constant 1.280000e+02 : f32
    %3 = vector.broadcast %cst_1 : f32 to vector<128x1xf32>
    %4 = arith.divf %2, %3 : vector<128x1xf32>
    %5 = vector.broadcast %4 : vector<128x1xf32> to vector<128x128xf32>
    %6 = arith.subf %0, %5 : vector<128x128xf32>
    %7 = arith.mulf %6, %6 : vector<128x128xf32>
    %cst_2 = arith.constant dense<0.000000e+00> : vector<128xf32>
    %8 = vector.multi_reduction <add>, %7, %cst_2 [1] : vector<128x128xf32> to vector<128xf32>
    %9 = vector.shape_cast %8 : vector<128xf32> to vector<128x1xf32>
    %cst_3 = arith.constant 7.812500e-03 : f32
    %10 = vector.broadcast %cst_3 : f32 to vector<128x1xf32>
    %11 = arith.mulf %9, %10 : vector<128x1xf32>
    %cst_4 = arith.constant 9.99999974E-6 : f32
    %12 = vector.broadcast %cst_4 : f32 to vector<128x1xf32>
    %13 = arith.addf %11, %12 : vector<128x1xf32>
    %14 = math.rsqrt %13 : vector<128x1xf32>
    %c0_5 = arith.constant 0 : index
    %c0_6 = arith.constant 0 : index
    %15 = vector.load %arg2[%c0_5, %c0_6] : memref<1x128xf32, #tpu.memory_space<vmem>>, vector<1x128xf32>
    %c0_7 = arith.constant 0 : index
    %c0_8 = arith.constant 0 : index
    %16 = vector.load %arg3[%c0_7, %c0_8] : memref<1x128xf32, #tpu.memory_space<vmem>>, vector<1x128xf32>
    %17 = vector.broadcast %14 : vector<128x1xf32> to vector<128x128xf32>
    %18 = arith.mulf %6, %17 : vector<128x128xf32>
    %19 = vector.broadcast %15 : vector<1x128xf32> to vector<128x128xf32>
    %20 = arith.mulf %18, %19 : vector<128x128xf32>
    %21 = vector.broadcast %16 : vector<1x128xf32> to vector<128x128xf32>
    %22 = arith.addf %20, %21 : vector<128x128xf32>
    %c0_9 = arith.constant 0 : index
    %c0_10 = arith.constant 0 : index
    %23 = vector.load %arg4[%c0_9, %c0_10] : memref<128x128xf32, #tpu.memory_space<vmem>>, vector<128x128xf32>
    tpu.vector_store %arg4[%c0_9, %c0_10], %22 {strides = array<i32>} : memref<128x128xf32, #tpu.memory_space<vmem>>, vector<128x128xf32>,
    return
  }
  func.func @transform_0(%arg0: i32) -> (i32, i32) {
    %c0_i32 = arith.constant 0 : i32
    %c0_i32_0 = arith.constant 0 : i32
    return %arg0, %c0_i32 : i32, i32
  }
  func.func @transform_1(%arg0: i32) -> (i32, i32) {
    %c0_i32 = arith.constant 0 : i32
    %c0_i32_0 = arith.constant 0 : i32
    %c0_i32_1 = arith.constant 0 : i32
    return %c0_i32, %c0_i32_0 : i32, i32
  }
  func.func @transform_2(%arg0: i32) -> (i32, i32) {
    %c0_i32 = arith.constant 0 : i32
    %c0_i32_0 = arith.constant 0 : i32
    %c0_i32_1 = arith.constant 0 : i32
    return %c0_i32, %c0_i32_0 : i32, i32
  }
  func.func @transform_3(%arg0: i32) -> (i32, i32) {
    %c0_i32 = arith.constant 0 : i32
    %c0_i32_0 = arith.constant 0 : i32
    return %arg0, %c0_i32 : i32, i32
  }
}

</mosaic_0001>

<llo_original>
// kernel: tpu_custom_call.1
$region0: #{tpu_custom_call.1}
  #allocation0 [shape = 'u32[]', space=smem, size = 0x4, offset = 0x4, fixed_abs, tag = 'smem constant byte address 0x4 - core index']
  #allocation1 [shape = 'u32[144,128]{1,0:T(1,128)}', space=vmem, size = 0x12000, scoped, tag = 'internal scratch']
  %s0 = inlined_call_operand.hbm [shape: f32[128,128], index: 0, kind: input, shape index: {}]
  %s1 = inlined_call_operand.vmem [shape: f32[1,128], index: 1, kind: input, shape index: {}]
  %s2 = inlined_call_operand.vmem [shape: f32[1,128], index: 2, kind: input, shape index: {}]
  %s3 = inlined_call_operand.hbm [shape: f32[128,128], index: 3, kind: output, shape index: {}]
  %s4 = sld [smem:[#allocation0]]
  $region26: #{tpu_custom_call.1} parent=0
    _
  %s6 = ssub.s32 1, %s4
  %s7 = scalar_select 0, %s6, %s4
  $region1: #{tpu_custom_call.1} parent=0
    #allocation2 [shape = 'u8[65536]{0}', space=vmem, size = 0x10000, scoped, tag = 'input window, operand 0, single buffered']
    #allocation3 [shape = 's32[1]{0}', space=sflag, size = 0x4, scoped, tag = 'scoped memory for tpu_custom_call.1']
    #allocation4 [shape = 's32[1]{0}', space=sflag, size = 0x4, scoped, tag = 'scoped memory for tpu_custom_call.1']
    #allocation5 [shape = 'u8[65536]{0}', space=vmem, size = 0x10000, scoped, tag = 'output window, operand 0, single buffered']
    %8 = vsyncpa [#allocation3], 0
    %9 = vsyncpa [#allocation4], 0
    // Predicated region
    $region2: #{tpu_custom_call.1} parent=1 // pred_check
      _
    $region3: #{tpu_custom_call.1} parent=1 // pred_check_branch
      %11 = sbr.rel (0) target = $region5
    $region4: #{tpu_custom_call.1} parent=1 // pred_region
      %s13 = ssub.s32 2048, 2048
      %14 = vsyncadd [#allocation3], %s13
      %s15 = sshll.u32 [#allocation2], 4
      %s16 = int_to_ptr.vmem [resolvable:$true] %s15
      %21 = dma.hbm_to_vmem [thread:$0]  %s0, 2048, %s16, [#allocation3], 128, 128, 8
    $region5: #{tpu_custom_call.1} parent=1 // pred_fallthru
      _
    // Predicated region
    $region6: #{tpu_custom_call.1} parent=1 // pred_check
      _
    $region7: #{tpu_custom_call.1} parent=1 // pred_check_branch
      %23 = sbr.rel (0) target = $region9
    $region8: #{tpu_custom_call.1} parent=1 // pred_region
      _
    $region9: #{tpu_custom_call.1} parent=1 // pred_fallthru
      _
    // Predicated region
    $region10: #{tpu_custom_call.1} parent=1 // pred_check
      _
    $region11: #{tpu_custom_call.1} parent=1 // pred_check_branch
      %25 = sbr.rel (0) target = $region13
    $region12: #{tpu_custom_call.1} parent=1 // pred_region
      _
    $region13: #{tpu_custom_call.1} parent=1 // pred_fallthru
      _
    // Predicated region
    $region14: #{tpu_custom_call.1} parent=1 // pred_check
      _
    $region15: #{tpu_custom_call.1} parent=1 // pred_check_branch
      %27 = sbr.rel (0) target = $region17
    $region16: #{tpu_custom_call.1} parent=1 // pred_region
      %28 = dma.done [#allocation3], 2048
    $region17: #{tpu_custom_call.1} parent=1 // pred_fallthru
      _
    %v29 = vld [vmem:[#allocation2] sm:$0xff]
    %v30 = vld [vmem:[#allocation2 + $0x8] sm:$0xff]
    %v31 = vld [vmem:[#allocation2 + $0x10] sm:$0xff]
    %v32 = vld [vmem:[#allocation2 + $0x18] sm:$0xff]
    %v33 = vld [vmem:[#allocation2 + $0x20] sm:$0xff]
    %v34 = vld [vmem:[#allocation2 + $0x28] sm:$0xff]
    %v35 = vld [vmem:[#allocation2 + $0x30] sm:$0xff]
    %v36 = vld [vmem:[#allocation2 + $0x38] sm:$0xff]
    %v37 = vld [vmem:[#allocation2 + $0x40] sm:$0xff]
    %v38 = vld [vmem:[#allocation2 + $0x48] sm:$0xff]
    %v39 = vld [vmem:[#allocation2 + $0x50] sm:$0xff]
    %v40 = vld [vmem:[#allocation2 + $0x58] sm:$0xff]
    %v41 = vld [vmem:[#allocation2 + $0x60] sm:$0xff]
    %v42 = vld [vmem:[#allocation2 + $0x68] sm:$0xff]
    %v43 = vld [vmem:[#allocation2 + $0x70] sm:$0xff]
    %v44 = vld [vmem:[#allocation2 + $0x78] sm:$0xff]
    %45 = vadd.xlane.f32.xlu0 %v29
    %v46 = vpop.xlane.xlu0 %45
    %47 = vadd.xlane.f32.xlu0 %v30
    %v48 = vpop.xlane.xlu0 %47
    %49 = vadd.xlane.f32.xlu0 %v31
    %v50 = vpop.xlane.xlu0 %49
    %51 = vadd.xlane.f32.xlu0 %v32
    %v52 = vpop.xlane.xlu0 %51
    %53 = vadd.xlane.f32.xlu0 %v33
    %v54 = vpop.xlane.xlu0 %53
    %55 = vadd.xlane.f32.xlu0 %v34
    %v56 = vpop.xlane.xlu0 %55
    %57 = vadd.xlane.f32.xlu0 %v35
    %v58 = vpop.xlane.xlu0 %57
    %59 = vadd.xlane.f32.xlu0 %v36
    %v60 = vpop.xlane.xlu0 %59
    %61 = vadd.xlane.f32.xlu0 %v37
    %v62 = vpop.xlane.xlu0 %61
    %63 = vadd.xlane.f32.xlu0 %v38
    %v64 = vpop.xlane.xlu0 %63
    %65 = vadd.xlane.f32.xlu0 %v39
    %v66 = vpop.xlane.xlu0 %65
    %67 = vadd.xlane.f32.xlu0 %v40
    %v68 = vpop.xlane.xlu0 %67
    %69 = vadd.xlane.f32.xlu0 %v41
    %v70 = vpop.xlane.xlu0 %69
    %71 = vadd.xlane.f32.xlu0 %v42
    %v72 = vpop.xlane.xlu0 %71
    %73 = vadd.xlane.f32.xlu0 %v43
    %v74 = vpop.xlane.xlu0 %73
    %75 = vadd.xlane.f32.xlu0 %v44
    %v76 = vpop.xlane.xlu0 %75
    %v77 = vrcp.pop 128.0
    %v78 = vmul.f32 %v46, %v77
    %v79 = vmul.f32 %v48, %v77
    %v80 = vmul.f32 %v50, %v77
    %v81 = vmul.f32 %v52, %v77
    %v82 = vmul.f32 %v54, %v77
    %v83 = vmul.f32 %v56, %v77
    %v84 = vmul.f32 %v58, %v77
    %v85 = vmul.f32 %v60, %v77
    %v86 = vmul.f32 %v62, %v77
    %v87 = vmul.f32 %v64, %v77
    %v88 = vmul.f32 %v66, %v77
    %v89 = vmul.f32 %v68, %v77
    %v90 = vmul.f32 %v70, %v77
    %v91 = vmul.f32 %v72, %v77
    %v92 = vmul.f32 %v74, %v77
    %v93 = vmul.f32 %v76, %v77
    %v94 = vsub.f32 %v29, %v78
    %v95 = vsub.f32 %v30, %v79
    %v96 = vsub.f32 %v31, %v80
    %v97 = vsub.f32 %v32, %v81
    %v98 = vsub.f32 %v33, %v82
    %v99 = vsub.f32 %v34, %v83
    %v100 = vsub.f32 %v35, %v84
    %v101 = vsub.f32 %v36, %v85
    %v102 = vsub.f32 %v37, %v86
    %v103 = vsub.f32 %v38, %v87
    %v104 = vsub.f32 %v39, %v88
    %v105 = vsub.f32 %v40, %v89
    %v106 = vsub.f32 %v41, %v90
    %v107 = vsub.f32 %v42, %v91
    %v108 = vsub.f32 %v43, %v92
    %v109 = vsub.f32 %v44, %v93
    %v110 = vmul.f32 %v94, %v94
    %v111 = vmul.f32 %v95, %v95
    %v112 = vmul.f32 %v96, %v96
    %v113 = vmul.f32 %v97, %v97
    %v114 = vmul.f32 %v98, %v98
    %v115 = vmul.f32 %v99, %v99
    %v116 = vmul.f32 %v100, %v100
    %v117 = vmul.f32 %v101, %v101
    %v118 = vmul.f32 %v102, %v102
    %v119 = vmul.f32 %v103, %v103
    %v120 = vmul.f32 %v104, %v104
    %v121 = vmul.f32 %v105, %v105
    %v122 = vmul.f32 %v106, %v106
    %v123 = vmul.f32 %v107, %v107
    %v124 = vmul.f32 %v108, %v108
    %v125 = vmul.f32 %v109, %v109
    %126 = vadd.xlane.f32.xlu0 %v110
    %v127 = vpop.xlane.xlu0 %126
    %128 = vadd.xlane.f32.xlu0 %v111
    %v129 = vpop.xlane.xlu0 %128
    %130 = vadd.xlane.f32.xlu0 %v112
    %v131 = vpop.xlane.xlu0 %130
    %132 = vadd.xlane.f32.xlu0 %v113
    %v133 = vpop.xlane.xlu0 %132
    %134 = vadd.xlane.f32.xlu0 %v114
    %v135 = vpop.xlane.xlu0 %134
    %136 = vadd.xlane.f32.xlu0 %v115
    %v137 = vpop.xlane.xlu0 %136
    %138 = vadd.xlane.f32.xlu0 %v116
    %v139 = vpop.xlane.xlu0 %138
    %140 = vadd.xlane.f32.xlu0 %v117
    %v141 = vpop.xlane.xlu0 %140
    %142 = vadd.xlane.f32.xlu0 %v118
    %v143 = vpop.xlane.xlu0 %142
    %144 = vadd.xlane.f32.xlu0 %v119
    %v145 = vpop.xlane.xlu0 %144
    %146 = vadd.xlane.f32.xlu0 %v120
    %v147 = vpop.xlane.xlu0 %146
    %148 = vadd.xlane.f32.xlu0 %v121
    %v149 = vpop.xlane.xlu0 %148
    %150 = vadd.xlane.f32.xlu0 %v122
    %v151 = vpop.xlane.xlu0 %150
    %152 = vadd.xlane.f32.xlu0 %v123
    %v153 = vpop.xlane.xlu0 %152
    %154 = vadd.xlane.f32.xlu0 %v124
    %v155 = vpop.xlane.xlu0 %154
    %156 = vadd.xlane.f32.xlu0 %v125
    %v157 = vpop.xlane.xlu0 %156
    %v158 = vmul.f32 %v127, 0.0078125
    %v159 = vmul.f32 %v129, 0.0078125
    %v160 = vmul.f32 %v131, 0.0078125
    %v161 = vmul.f32 %v133, 0.0078125
    %v162 = vmul.f32 %v135, 0.0078125
    %v163 = vmul.f32 %v137, 0.0078125
    %v164 = vmul.f32 %v139, 0.0078125
    %v165 = vmul.f32 %v141, 0.0078125
    %v166 = vmul.f32 %v143, 0.0078125
    %v167 = vmul.f32 %v145, 0.0078125
    %v168 = vmul.f32 %v147, 0.0078125
    %v169 = vmul.f32 %v149, 0.0078125
    %v170 = vmul.f32 %v151, 0.0078125
    %v171 = vmul.f32 %v153, 0.0078125
    %v172 = vmul.f32 %v155, 0.0078125
    %v173 = vmul.f32 %v157, 0.0078125
    %v174 = vadd.f32 %v158, 1e-05
    %v175 = vadd.f32 %v159, 1e-05
    %v176 = vadd.f32 %v160, 1e-05
    %v177 = vadd.f32 %v161, 1e-05
    %v178 = vadd.f32 %v162, 1e-05
    %v179 = vadd.f32 %v163, 1e-05
    %v180 = vadd.f32 %v164, 1e-05
    %v181 = vadd.f32 %v165, 1e-05
    %v182 = vadd.f32 %v166, 1e-05
    %v183 = vadd.f32 %v167, 1e-05
    %v184 = vadd.f32 %v168, 1e-05
    %v185 = vadd.f32 %v169, 1e-05
    %v186 = vadd.f32 %v170, 1e-05
    %v187 = vadd.f32 %v171, 1e-05
    %v188 = vadd.f32 %v172, 1e-05
    %v189 = vadd.f32 %v173, 1e-05
    %v190 = vrsqrt.pop %v174
    %v191 = vrsqrt.pop %v175
    %v192 = vrsqrt.pop %v176
    %v193 = vrsqrt.pop %v177
    %v194 = vrsqrt.pop %v178
    %v195 = vrsqrt.pop %v179
    %v196 = vrsqrt.pop %v180
    %v197 = vrsqrt.pop %v181
    %v198 = vrsqrt.pop %v182
    %v199 = vrsqrt.pop %v183
    %v200 = vrsqrt.pop %v184
    %v201 = vrsqrt.pop %v185
    %v202 = vrsqrt.pop %v186
    %v203 = vrsqrt.pop %v187
    %v204 = vrsqrt.pop %v188
    %v205 = vrsqrt.pop %v189
    %v206 = vld [vmem:[%s1] sm:$0x1]
    %v207 = vld [vmem:[%s2] sm:$0x1]
    %v208 = vmul.f32 %v94, %v190
    %v209 = vmul.f32 %v95, %v191
    %v210 = vmul.f32 %v96, %v192
    %v211 = vmul.f32 %v97, %v193
    %v212 = vmul.f32 %v98, %v194
    %v213 = vmul.f32 %v99, %v195
    %v214 = vmul.f32 %v100, %v196
    %v215 = vmul.f32 %v101, %v197
    %v216 = vmul.f32 %v102, %v198
    %v217 = vmul.f32 %v103, %v199
    %v218 = vmul.f32 %v104, %v200
    %v219 = vmul.f32 %v105, %v201
    %v220 = vmul.f32 %v106, %v202
    %v221 = vmul.f32 %v107, %v203
    %v222 = vmul.f32 %v108, %v204
    %v223 = vmul.f32 %v109, %v205
    %v225 = vlaneseq
    %v226 = vshrl.u32 %v225, 7
    %v227 = vsub.s32 0, %v226
    %v228 = vrot.slane %v206, %v227
    %v230 = vmul.f32 %v208, %v228
    %v231 = vmul.f32 %v209, %v228
    %v232 = vmul.f32 %v210, %v228
    %v233 = vmul.f32 %v211, %v228
    %v234 = vmul.f32 %v212, %v228
    %v235 = vmul.f32 %v213, %v228
    %v236 = vmul.f32 %v214, %v228
    %v237 = vmul.f32 %v215, %v228
    %v238 = vmul.f32 %v216, %v228
    %v239 = vmul.f32 %v217, %v228
    %v240 = vmul.f32 %v218, %v228
    %v241 = vmul.f32 %v219, %v228
    %v242 = vmul.f32 %v220, %v228
    %v243 = vmul.f32 %v221, %v228
    %v244 = vmul.f32 %v222, %v228
    %v245 = vmul.f32 %v223, %v228
    %v247 = vlaneseq
    %v248 = vshrl.u32 %v247, 7
    %v249 = vsub.s32 0, %v248
    %v250 = vrot.slane %v207, %v249
    %v252 = vadd.f32 %v230, %v250
    %v253 = vadd.f32 %v231, %v250
    %v254 = vadd.f32 %v232, %v250
    %v255 = vadd.f32 %v233, %v250
    %v256 = vadd.f32 %v234, %v250
    %v257 = vadd.f32 %v235, %v250
    %v258 = vadd.f32 %v236, %v250
    %v259 = vadd.f32 %v237, %v250
    %v260 = vadd.f32 %v238, %v250
    %v261 = vadd.f32 %v239, %v250
    %v262 = vadd.f32 %v240, %v250
    %v263 = vadd.f32 %v241, %v250
    %v264 = vadd.f32 %v242, %v250
    %v265 = vadd.f32 %v243, %v250
    %v266 = vadd.f32 %v244, %v250
    %v267 = vadd.f32 %v245, %v250
    %268 = vst [vmem:[#allocation5] sm:$0xff] %v252
    %269 = vst [vmem:[#allocation5 + $0x8] sm:$0xff] %v253
    %270 = vst [vmem:[#allocation5 + $0x10] sm:$0xff] %v254
    %271 = vst [vmem:[#allocation5 + $0x18] sm:$0xff] %v255
    %272 = vst [vmem:[#allocation5 + $0x20] sm:$0xff] %v256
    %273 = vst [vmem:[#allocation5 + $0x28] sm:$0xff] %v257
    %274 = vst [vmem:[#allocation5 + $0x30] sm:$0xff] %v258
    %275 = vst [vmem:[#allocation5 + $0x38] sm:$0xff] %v259
    %276 = vst [vmem:[#allocation5 + $0x40] sm:$0xff] %v260
    %277 = vst [vmem:[#allocation5 + $0x48] sm:$0xff] %v261
    %278 = vst [vmem:[#allocation5 + $0x50] sm:$0xff] %v262
    %279 = vst [vmem:[#allocation5 + $0x58] sm:$0xff] %v263
    %280 = vst [vmem:[#allocation5 + $0x60] sm:$0xff] %v264
    %281 = vst [vmem:[#allocation5 + $0x68] sm:$0xff] %v265
    %282 = vst [vmem:[#allocation5 + $0x70] sm:$0xff] %v266
    %283 = vst [vmem:[#allocation5 + $0x78] sm:$0xff] %v267
    // Predicated region
    $region18: #{tpu_custom_call.1} parent=1 // pred_check
      _
    $region19: #{tpu_custom_call.1} parent=1 // pred_check_branch
      %285 = sbr.rel (0) target = $region21
    $region20: #{tpu_custom_call.1} parent=1 // pred_region
      %s287 = ssub.s32 2048, 2048
      %288 = vsyncadd [#allocation4], %s287
      %s289 = sshll.u32 [#allocation5], 4
      %s290 = int_to_ptr.vmem [resolvable:$true] %s289
      %295 = dma.vmem_to_hbm [thread:$0]  %s290, 2048, %s3, [#allocation4], 128, 128, 8
    $region21: #{tpu_custom_call.1} parent=1 // pred_fallthru
      _
    // Predicated region
    $region22: #{tpu_custom_call.1} parent=1 // pred_check
      _
    $region23: #{tpu_custom_call.1} parent=1 // pred_check_branch
      %297 = sbr.rel (0) target = $region25
    $region24: #{tpu_custom_call.1} parent=1 // pred_region
      %298 = dma.done [#allocation4], 2048
    $region25: #{tpu_custom_call.1} parent=1 // pred_fallthru
      _
    %299 = vsyncpa [#allocation3], 1
    %300 = vsyncpa [#allocation4], 1

</llo_original>
